<compile_context>
chip_gen: v7x
topology: tpu7x:2x2x1
jax: 0.10.0
libtpu: 0.0.40
codegen_flags: <defaults>
</compile_context>

<pallas_src>
import functools

import numpy as np
import jax
import jax.numpy as jnp
from jax import lax
from jax.experimental import pallas as pl
from jax.experimental.pallas import tpu as pltpu


def make_shift_weight(inp_channels, move_channels=2):
    """Replicates ShiftConv2d_4.__init__ exactly (incl. Python slice semantics)."""
    w = np.zeros((inp_channels, 1, 3, 3), dtype=np.float32)
    mid = inp_channels // 2
    mc = move_channels
    up_channels = (mid - mc * 2, mid - mc)
    down_channels = (mid - mc, mid)
    left_channels = (mid, mid + mc)
    right_channels = (mid + mc, mid + mc * 2)
    w[left_channels[0]:left_channels[1], 0, 1, 2] = 1.0
    w[right_channels[0]:right_channels[1], 0, 1, 0] = 1.0
    w[up_channels[0]:up_channels[1], 0, 2, 1] = 1.0
    w[down_channels[0]:down_channels[1], 0, 0, 1] = 1.0
    w[0:mid - mc * 2, 0, 1, 1] = 1.0
    w[mid + mc * 2:, 0, 1, 1] = 1.0
    return jnp.asarray(w)


def _shift_dwconv_kernel(w_ref, m_ref, x_ref, o_ref, *, HW, offsets, move_pixels, nb):
    # w_ref : (CB, T)  f32  per-channel weight of each live tap
    # m_ref : (T, HW)  f32  per-lane boundary mask (zero padding + roll wrap-around kill)
    # x_ref : (NB, CB, HW)  block of images, spatially flattened (lane dim = H*W)
    # o_ref : (NB, CB, HW)
    ntaps = len(offsets)
    # Hoist the folded (channel x position) multipliers out of the batch / pass /
    # tap loops: JAX does not CSE broadcast_in_dim, so do it once per grid step.
    wm = [w_ref[:, t:t + 1] * m_ref[t:t + 1, :] for t in range(ntaps)]   # each (CB, HW)

    def one_image(b, carry):
        cur = x_ref[b].astype(jnp.float32)                     # (CB, HW), cast once
        for _ in range(move_pixels):                           # fused conv passes
            acc = None
            for t in range(ntaps):
                off = offsets[t]
                # out[p] reads src[p + off]; wrap-around and out-of-image lanes
                # are zeroed by the mask folded into wm[t].
                src = cur if off == 0 else pltpu.roll(cur, shift=(-off) % HW, axis=1)
                term = wm[t] * src
                acc = term if acc is None else acc + term      # init from first tap
            cur = acc
        o_ref[b] = cur.astype(o_ref.dtype)
        return carry

    if nb == 1:
        one_image(0, 0)
    else:
        lax.fori_loop(0, nb, one_image, 0)


def shift_conv2d_4(x, weight, move_pixels=1):
    """Forward of ShiftConv2d_4: `move_pixels` fused passes of depthwise 3x3 conv
    (stride 1, padding 1, groups = C, no bias).  x: (N, C, H, W), weight: (C,1,3,3)."""
    N, C, H, W = x.shape
    HW = H * W
    itemsize = x.dtype.itemsize

    # ---- static tap specialization: drop all-zero taps (one-hot shift weight ->
    #      5 live taps); generic 9-tap fallback for traced weights. ----
    try:
        w_np = np.asarray(jax.device_get(weight))
        live = [(di, dj) for di in range(3) for dj in range(3)
                if bool(np.any(w_np[:, 0, di, dj] != 0.0))]
    except Exception:
        live = [(di, dj) for di in range(3) for dj in range(3)]
    if not live:
        live = [(1, 1)]
    T = len(live)
    offsets = tuple((di - 1) * W + (dj - 1) for (di, dj) in live)

    # Per-channel weight of each live tap: (C, T).
    w_f = jnp.asarray(weight, jnp.float32)[:, 0, :, :]                    # (C, 3, 3)
    w_cols = jnp.stack([w_f[:, di, dj] for (di, dj) in live], axis=-1)    # (C, T)

    # Per-lane boundary masks (T, HW): emulate zero padding on the flattened
    # h*W + w lane axis; they also zero every lane the circular roll wraps.
    hh, ww = np.meshgrid(np.arange(H), np.arange(W), indexing="ij")
    masks_np = np.empty((T, HW), np.float32)
    for t, (di, dj) in enumerate(live):
        ok_h = (hh + di - 1 >= 0) & (hh + di - 1 < H)
        ok_w = (ww + dj - 1 >= 0) & (ww + dj - 1 < W)
        masks_np[t] = (ok_h & ok_w).astype(np.float32).reshape(HW)
    masks = jnp.asarray(masks_np)

    # ---- zero-copy lane-dense view (no HBM transpose): (N, C, H, W) -> (N, C, H*W) ----
    # Note: if H*W is not a multiple of 128 the stores become masked (correct,
    # just slower); typical SR patch sizes satisfy it.
    x_l = x.reshape(N, C, HW)

    # ---- block sizing, chip-aware ----
    try:
        cap = int(pltpu.get_tpu_info().vmem_capacity_bytes)
    except Exception:
        cap = 64 << 20                                   # assume the smallest (v7x)
    budget = min(cap // 2, 32 << 20)

    def est_vmem(nb, cb):
        return (4 * nb * cb * HW * itemsize              # double-buffered in + out blocks
                + (T + 4) * cb * HW * 4                  # hoisted tap tables + temporaries
                + 2 * (cb * T + T * HW) * 4)             # resident weight / mask inputs

    # Channel tiling: depthwise conv -> channel blocks need no halo.  CB must be
    # a multiple of 8 (sublane tiling) or equal to C.
    cb_options = [C]
    if C % 8 == 0:
        cb_options += [d for d in range(8, C, 8) if C % d == 0]
    cb_options.sort(reverse=True)
    CB = cb_options[-1]
    for cb in cb_options:                                # largest block that fits
        if est_vmem(1, cb) <= budget:
            CB = cb
            break

    # Batch blocking: a few MiB per DMA to amortize per-grid-step overhead.
    NB = 1
    for nb in range(1, N + 1):
        if N % nb == 0 and nb * CB * HW * itemsize <= (4 << 20) and est_vmem(nb, CB) <= budget:
            NB = nb

    grid = (C // CB, N // NB)

    # Always set vmem_limit_bytes (v5e default scoped limit is only 16 MiB) and
    # clamp it to the chip's physical VMEM with headroom (64 MiB on v7x).
    est = est_vmem(NB, CB)
    floor_ = min(32 << 20, cap - (8 << 20))
    vmem_limit = int(min(max(est + (8 << 20), floor_), cap - (8 << 20)))

    kernel = functools.partial(_shift_dwconv_kernel, HW=HW, offsets=offsets,
                               move_pixels=move_pixels, nb=NB)

    out_l = pl.pallas_call(
        kernel,
        out_shape=jax.ShapeDtypeStruct((N, C, HW), x.dtype),
        grid_spec=pltpu.PrefetchScalarGridSpec(
            num_scalar_prefetch=0,
            grid=grid,                                    # (channel blocks, batch blocks)
            in_specs=[
                pl.BlockSpec((CB, T), lambda ci, ni: (ci, 0)),   # per-channel tap weights
                pl.BlockSpec((T, HW), lambda ci, ni: (0, 0)),    # boundary masks (resident)
                pl.BlockSpec((NB, CB, HW), lambda ci, ni: (ni, ci, 0)),
            ],
            out_specs=pl.BlockSpec((NB, CB, HW), lambda ci, ni: (ni, ci, 0)),
        ),
        compiler_params=pltpu.CompilerParams(
            dimension_semantics=("parallel", "parallel"),
            vmem_limit_bytes=vmem_limit),
    )(w_cols, masks, x_l)

    # Free reshape back to NCHW (no transpose).
    return out_l.reshape(N, C, H, W)


def _ref_shift_conv(x, weight, move_pixels=1):
    # Pure-JAX reference: grouped conv identical to F.conv2d(..., groups=C).
    C = x.shape[1]
    for _ in range(move_pixels):
        x = lax.conv_general_dilated(
            x, weight, window_strides=(1, 1), padding=((1, 1), (1, 1)),
            dimension_numbers=("NCHW", "OIHW", "NCHW"),
            feature_group_count=C)
    return x


if __name__ == "__main__":
    inp_channels = 8
    move_channels = 2
    move_pixels = 1

    key = jax.random.PRNGKey(0)
    x = jax.random.normal(key, (2, inp_channels, 16, 16), dtype=jnp.float32)
    weight = make_shift_weight(inp_channels, move_channels)

    out = jax.block_until_ready(shift_conv2d_4(x, weight, move_pixels))
    ref = jax.block_until_ready(_ref_shift_conv(x, weight, move_pixels))
    assert out.shape == x.shape and out.dtype == x.dtype
    np.testing.assert_allclose(np.asarray(out), np.asarray(ref), rtol=1e-6, atol=1e-6)

    # Also validate the fused multi-pass (move_pixels > 1) path.
    out2 = jax.block_until_ready(shift_conv2d_4(x, weight, 2))
    ref2 = jax.block_until_ready(_ref_shift_conv(x, weight, 2))
    np.testing.assert_allclose(np.asarray(out2), np.asarray(ref2), rtol=1e-6, atol=1e-6)

    print("KERNEL_OK")
</pallas_src>

<mosaic_0001>
module attributes {stable_mosaic.version = 11 : i64} {
  func.func @_shift_dwconv_kernel(%arg0: i32, %arg1: i32, %arg2: memref<8x4xf32, #tpu.memory_space<vmem>>, %arg3: memref<4x256xf32, #tpu.memory_space<vmem>>, %arg4: memref<2x8x256xf32, #tpu.memory_space<vmem>>, %arg5: memref<2x8x256xf32, #tpu.memory_space<vmem>>) attributes {dimension_semantics = [#tpu.dimension_semantics<parallel>, #tpu.dimension_semantics<parallel>], iteration_bounds = array<i64: 1, 1>, scalar_prefetch = 0 : i64, scratch_operands = 0 : i64, tpu.core_type = #tpu.core_type<tc>, window_params = [{transform_indices = @transform_0, window_bounds = array<i64: 8, 4>}, {pipeline_mode = #tpu.pipeline_mode<synchronous>, transform_indices = @transform_1, window_bounds = array<i64: 4, 256>}, {transform_indices = @transform_2, window_bounds = array<i64: 2, 8, 256>}, {transform_indices = @transform_3, window_bounds = array<i64: 2, 8, 256>}]} {
    %c0 = arith.constant 0 : index
    %c0_0 = arith.constant 0 : index
    %0 = vector.load %arg2[%c0, %c0_0] : memref<8x4xf32, #tpu.memory_space<vmem>>, vector<8x1xf32>
    %c0_1 = arith.constant 0 : index
    %c0_2 = arith.constant 0 : index
    %1 = vector.load %arg3[%c0_1, %c0_2] : memref<4x256xf32, #tpu.memory_space<vmem>>, vector<1x256xf32>
    %2 = vector.broadcast %0 : vector<8x1xf32> to vector<8x256xf32>
    %3 = vector.broadcast %1 : vector<1x256xf32> to vector<8x256xf32>
    %4 = arith.mulf %2, %3 : vector<8x256xf32>
    %c0_3 = arith.constant 0 : index
    %c1 = arith.constant 1 : index
    %5 = vector.load %arg2[%c0_3, %c1] : memref<8x4xf32, #tpu.memory_space<vmem>>, vector<8x1xf32>
    %c1_4 = arith.constant 1 : index
    %c0_5 = arith.constant 0 : index
    %6 = vector.load %arg3[%c1_4, %c0_5] : memref<4x256xf32, #tpu.memory_space<vmem>>, vector<1x256xf32>
    %7 = vector.broadcast %5 : vector<8x1xf32> to vector<8x256xf32>
    %8 = vector.broadcast %6 : vector<1x256xf32> to vector<8x256xf32>
    %9 = arith.mulf %7, %8 : vector<8x256xf32>
    %c0_6 = arith.constant 0 : index
    %c2 = arith.constant 2 : index
    %10 = vector.load %arg2[%c0_6, %c2] : memref<8x4xf32, #tpu.memory_space<vmem>>, vector<8x1xf32>
    %c2_7 = arith.constant 2 : index
    %c0_8 = arith.constant 0 : index
    %11 = vector.load %arg3[%c2_7, %c0_8] : memref<4x256xf32, #tpu.memory_space<vmem>>, vector<1x256xf32>
    %12 = vector.broadcast %10 : vector<8x1xf32> to vector<8x256xf32>
    %13 = vector.broadcast %11 : vector<1x256xf32> to vector<8x256xf32>
    %14 = arith.mulf %12, %13 : vector<8x256xf32>
    %c0_9 = arith.constant 0 : index
    %c3 = arith.constant 3 : index
    %15 = vector.load %arg2[%c0_9, %c3] : memref<8x4xf32, #tpu.memory_space<vmem>>, vector<8x1xf32>
    %c3_10 = arith.constant 3 : index
    %c0_11 = arith.constant 0 : index
    %16 = vector.load %arg3[%c3_10, %c0_11] : memref<4x256xf32, #tpu.memory_space<vmem>>, vector<1x256xf32>
    %17 = vector.broadcast %15 : vector<8x1xf32> to vector<8x256xf32>
    %18 = vector.broadcast %16 : vector<1x256xf32> to vector<8x256xf32>
    %19 = arith.mulf %17, %18 : vector<8x256xf32>
    %c0_i32 = arith.constant 0 : i32
    %c2_i32 = arith.constant 2 : i32
    %20 = arith.addi %c0_i32, %c2_i32 : i32
    %c1_i32 = arith.constant 1 : i32
    scf.for %arg6 = %c0_i32 to %20 step %c1_i32  : i32 {
      %21 = arith.index_cast %arg6 : i32 to index
      %c0_13 = arith.constant 0 : index
      %c0_14 = arith.constant 0 : index
      %22 = vector.load %arg4[%21, %c0_13, %c0_14] : memref<2x8x256xf32, #tpu.memory_space<vmem>>, vector<1x8x256xf32>
      %23 = vector.shape_cast %22 : vector<1x8x256xf32> to vector<8x256xf32>
      %c16_i32 = arith.constant 16 : i32
      %24 = tpu.dynamic_rotate %23 by %c16_i32 dim 1 : vector<8x256xf32>, i32 -> vector<8x256xf32>
      %25 = arith.mulf %4, %24 : vector<8x256xf32>
      %c1_i32_15 = arith.constant 1 : i32
      %26 = tpu.dynamic_rotate %23 by %c1_i32_15 dim 1 : vector<8x256xf32>, i32 -> vector<8x256xf32>
      %27 = arith.mulf %9, %26 : vector<8x256xf32>
      %28 = arith.addf %25, %27 : vector<8x256xf32>
      %c255_i32 = arith.constant 255 : i32
      %29 = tpu.dynamic_rotate %23 by %c255_i32 dim 1 : vector<8x256xf32>, i32 -> vector<8x256xf32>
      %30 = arith.mulf %14, %29 : vector<8x256xf32>
      %31 = arith.addf %28, %30 : vector<8x256xf32>
      %c240_i32 = arith.constant 240 : i32
      %32 = tpu.dynamic_rotate %23 by %c240_i32 dim 1 : vector<8x256xf32>, i32 -> vector<8x256xf32>
      %33 = arith.mulf %19, %32 : vector<8x256xf32>
      %34 = arith.addf %31, %33 : vector<8x256xf32>
      %35 = arith.index_cast %arg6 : i32 to index
      %c0_16 = arith.constant 0 : index
      %c0_17 = arith.constant 0 : index
      %36 = vector.load %arg5[%35, %c0_16, %c0_17] : memref<2x8x256xf32, #tpu.memory_space<vmem>>, vector<1x8x256xf32>
      %37 = vector.shape_cast %36 : vector<1x8x256xf32> to vector<8x256xf32>
      %38 = vector.shape_cast %34 : vector<8x256xf32> to vector<1x8x256xf32>
      tpu.vector_store %arg5[%35, %c0_16, %c0_17], %38 {strides = array<i32>} : memref<2x8x256xf32, #tpu.memory_space<vmem>>, vector<1x8x256xf32>,
    }
    %c2_i32_12 = arith.constant 2 : i32
    return
  }
  func.func @transform_0(%arg0: i32, %arg1: i32) -> (i32, i32) {
    %c0_i32 = arith.constant 0 : i32
    %c0_i32_0 = arith.constant 0 : i32
    return %arg0, %c0_i32 : i32, i32
  }
  func.func @transform_1(%arg0: i32, %arg1: i32) -> (i32, i32) {
    %c0_i32 = arith.constant 0 : i32
    %c0_i32_0 = arith.constant 0 : i32
    %c0_i32_1 = arith.constant 0 : i32
    return %c0_i32, %c0_i32_0 : i32, i32
  }
  func.func @transform_2(%arg0: i32, %arg1: i32) -> (i32, i32, i32) {
    %c0_i32 = arith.constant 0 : i32
    %c0_i32_0 = arith.constant 0 : i32
    return %arg1, %arg0, %c0_i32 : i32, i32, i32
  }
  func.func @transform_3(%arg0: i32, %arg1: i32) -> (i32, i32, i32) {
    %c0_i32 = arith.constant 0 : i32
    %c0_i32_0 = arith.constant 0 : i32
    return %arg1, %arg0, %c0_i32 : i32, i32, i32
  }
}

</mosaic_0001>

<llo_original>
// kernel: tpu_custom_call.1
$region0: #{tpu_custom_call.1}
  #allocation0 [shape = 'u32[]', space=smem, size = 0x4, offset = 0x4, fixed_abs, tag = 'smem constant byte address 0x4 - core index']
  #allocation1 [shape = 'u32[144,128]{1,0:T(1,128)}', space=vmem, size = 0x12000, scoped, tag = 'internal scratch']
  %s0 = inlined_call_operand.vmem [shape: f32[8,4], index: 0, kind: input, shape index: {}]
  %s1 = inlined_call_operand.vmem [shape: f32[4,256], index: 1, kind: input, shape index: {}]
  %s2 = inlined_call_operand.hbm [shape: f32[2,8,256], index: 2, kind: input, shape index: {}]
  %s3 = inlined_call_operand.hbm [shape: f32[2,8,256], index: 3, kind: output, shape index: {}]
  %s4 = sld [smem:[#allocation0]]
  $region33: #{tpu_custom_call.1} parent=0
    _
  %s6 = ssub.s32 1, %s4
  %s7 = scalar_select 0, %s6, %s4
  $region1: #{tpu_custom_call.1} parent=0
    #allocation2 [shape = 'u8[16384]{0}', space=vmem, size = 0x4000, scoped, tag = 'input window, operand 2, single buffered']
    #allocation3 [shape = 's32[1]{0}', space=sflag, size = 0x4, scoped, tag = 'scoped memory for tpu_custom_call.1']
    #allocation4 [shape = 's32[1]{0}', space=sflag, size = 0x4, scoped, tag = 'scoped memory for tpu_custom_call.1']
    #allocation5 [shape = 'u8[16384]{0}', space=vmem, size = 0x4000, scoped, tag = 'output window, operand 0, single buffered']
    %8 = vsyncpa [#allocation3], 0
    %9 = vsyncpa [#allocation4], 0
    // Predicated region
    $region2: #{tpu_custom_call.1} parent=1 // pred_check
      _
    $region3: #{tpu_custom_call.1} parent=1 // pred_check_branch
      %11 = sbr.rel (0) target = $region5
    $region4: #{tpu_custom_call.1} parent=1 // pred_region
      _
    $region5: #{tpu_custom_call.1} parent=1 // pred_fallthru
      _
    // Predicated region
    $region6: #{tpu_custom_call.1} parent=1 // pred_check
      _
    $region7: #{tpu_custom_call.1} parent=1 // pred_check_branch
      %13 = sbr.rel (0) target = $region9
    $region8: #{tpu_custom_call.1} parent=1 // pred_region
      _
    $region9: #{tpu_custom_call.1} parent=1 // pred_fallthru
      _
    // Predicated region
    $region10: #{tpu_custom_call.1} parent=1 // pred_check
      _
    $region11: #{tpu_custom_call.1} parent=1 // pred_check_branch
      %15 = sbr.rel (0) target = $region13
    $region12: #{tpu_custom_call.1} parent=1 // pred_region
      %s17 = ssub.s32 512, 512
      %18 = vsyncadd [#allocation3], %s17
      %s19 = sshll.u32 [#allocation2], 4
      %s20 = int_to_ptr.vmem [resolvable:$true] %s19
      %25 = dma.hbm_to_vmem [thread:$0]  %s2, 512, %s20, [#allocation3], 256, 256, 16
    $region13: #{tpu_custom_call.1} parent=1 // pred_fallthru
      _
    // Predicated region
    $region14: #{tpu_custom_call.1} parent=1 // pred_check
      _
    $region15: #{tpu_custom_call.1} parent=1 // pred_check_branch
      %27 = sbr.rel (0) target = $region17
    $region16: #{tpu_custom_call.1} parent=1 // pred_region
      %28 = dma.done [#allocation3], 512
    $region17: #{tpu_custom_call.1} parent=1 // pred_fallthru
      _
    %v29 = vld [vmem:[%s0] sm:$0xff]
    %v30 = vld [vmem:[%s1] ss:$4 sm:$0x3]
    %32 = vset.pattern.permute.xlu0 0
    %33 = vperm.xlu0 %32, %v29
    %v34 = vpop.permute.xlu0 %33
    %v37 = vlaneseq
    %v38 = vshrl.u32 %v37, 7
    %v39 = vsub.s32 0, %v38
    %v40 = vrot.slane %v30, %v39
    %v41 = vlaneseq
    %v42 = vshrl.u32 %v41, 7
    %v43 = vsub.s32 1, %v42
    %v44 = vrot.slane %v30, %v43
    %v47 = vmul.f32 %v34, %v40
    %v48 = vmul.f32 %v34, %v44
    %s49 = scalar_lea.vmem %s1, 1
    %v50 = vld [vmem:[%s49] ss:$4 sm:$0x3]
    %51 = vset.pattern.permute.xlu0 1
    %52 = vperm.xlu0 %51, %v29
    %v53 = vpop.permute.xlu0 %52
    %v56 = vlaneseq
    %v57 = vshrl.u32 %v56, 7
    %v58 = vsub.s32 0, %v57
    %v59 = vrot.slane %v50, %v58
    %v60 = vlaneseq
    %v61 = vshrl.u32 %v60, 7
    %v62 = vsub.s32 1, %v61
    %v63 = vrot.slane %v50, %v62
    %v66 = vmul.f32 %v53, %v59
    %v67 = vmul.f32 %v53, %v63
    %s68 = scalar_lea.vmem %s1, 2
    %v69 = vld [vmem:[%s68] ss:$4 sm:$0x3]
    %70 = vset.pattern.permute.xlu0 2
    %71 = vperm.xlu0 %70, %v29
    %v72 = vpop.permute.xlu0 %71
    %v75 = vlaneseq
    %v76 = vshrl.u32 %v75, 7
    %v77 = vsub.s32 0, %v76
    %v78 = vrot.slane %v69, %v77
    %v79 = vlaneseq
    %v80 = vshrl.u32 %v79, 7
    %v81 = vsub.s32 1, %v80
    %v82 = vrot.slane %v69, %v81
    %v85 = vmul.f32 %v72, %v78
    %v86 = vmul.f32 %v72, %v82
    %s87 = scalar_lea.vmem %s1, 3
    %v88 = vld [vmem:[%s87] ss:$4 sm:$0x3]
    %89 = vset.pattern.permute.xlu0 3
    %90 = vperm.xlu0 %89, %v29
    %v91 = vpop.permute.xlu0 %90
    %v94 = vlaneseq
    %v95 = vshrl.u32 %v94, 7
    %v96 = vsub.s32 0, %v95
    %v97 = vrot.slane %v88, %v96
    %v98 = vlaneseq
    %v99 = vshrl.u32 %v98, 7
    %v100 = vsub.s32 1, %v99
    %v101 = vrot.slane %v88, %v100
    %v104 = vmul.f32 %v91, %v97
    %v105 = vmul.f32 %v91, %v101
    loop: start=0, step=1, limit=2
    $region18: #{tpu_custom_call.1} parent=1 // loop_pre_header
      _
    $region19: #{tpu_custom_call.1} parent=1 // loop_header
      %s107 = sphi 0, %s111
      %p108 = scmp.ge.s32.totalorder %s107, 2
    $region20: #{tpu_custom_call.1} parent=1 // loop_header_branch
      %110 = sbr.rel (%p108) target = $region24
    $region21: #{tpu_custom_call.1} parent=1 // loop_body
      %s112 = smul.u32 %s107, 2
      %s113 = smul.addr %s112, 8
      %s114 = scalar_lea.vmem [#allocation2], %s113
      %v115 = vld [vmem:[%s114] sm:$0xff]
      %v116 = vld [vmem:[%s114 + $0x8] sm:$0xff]
      %117 = vrot.lane.b32.xlu0 %v115, 16
      %v118 = vpop.permute.xlu0 %117
      %119 = vrot.lane.b32.xlu0 %v116, 16
      %v120 = vpop.permute.xlu0 %119
      %v121 = vlaneseq
      %v122 = vand.u32 %v121, 127
      %vm123 = vcmp.lt.s32.totalorder %v122, 16
      %v124 = vsel %vm123, %v118, %v120
      %v125 = vsel %vm123, %v120, %v118
      %v126 = vmul.f32 %v47, %v125
      %v127 = vmul.f32 %v48, %v124
      %128 = vrot.lane.b32.xlu0 %v115, 1
      %v129 = vpop.permute.xlu0 %128
      %130 = vrot.lane.b32.xlu0 %v116, 1
      %v131 = vpop.permute.xlu0 %130
      %vm132 = vcmp.lt.s32.totalorder %v122, 1
      %v133 = vsel %vm132, %v129, %v131
      %v134 = vsel %vm132, %v131, %v129
      %v135 = vmul.f32 %v66, %v134
      %v136 = vmul.f32 %v67, %v133
      %v137 = vadd.f32 %v126, %v135
      %v138 = vadd.f32 %v127, %v136
      %139 = vrot.lane.b32.xlu0 %v115, 127
      %v140 = vpop.permute.xlu0 %139
      %141 = vrot.lane.b32.xlu0 %v116, 127
      %v142 = vpop.permute.xlu0 %141
      %vm143 = vcmp.lt.s32.totalorder %v122, 127
      %v144 = vsel %vm143, %v140, %v142
      %v145 = vsel %vm143, %v142, %v140
      %v146 = vmul.f32 %v85, %v144
      %v147 = vmul.f32 %v86, %v145
      %v148 = vadd.f32 %v137, %v146
      %v149 = vadd.f32 %v138, %v147
      %150 = vrot.lane.b32.xlu0 %v115, 112
      %v151 = vpop.permute.xlu0 %150
      %152 = vrot.lane.b32.xlu0 %v116, 112
      %v153 = vpop.permute.xlu0 %152
      %vm154 = vcmp.lt.s32.totalorder %v122, 112
      %v155 = vsel %vm154, %v151, %v153
      %v156 = vsel %vm154, %v153, %v151
      %v157 = vmul.f32 %v104, %v155
      %v158 = vmul.f32 %v105, %v156
      %v159 = vadd.f32 %v148, %v157
      %v160 = vadd.f32 %v149, %v158
      %s161 = smul.addr %s112, 8
      %s162 = scalar_lea.vmem [#allocation5], %s161
      %163 = vst [vmem:[%s162] sm:$0xff] %v159
      %164 = vst [vmem:[%s162 + $0x8] sm:$0xff] %v160
    $region22: #{tpu_custom_call.1} parent=1 // loop_footer
      %s111 = sadd.s32 1, %s107
    $region23: #{tpu_custom_call.1} parent=1 // loop_footer_branch
      %106 = sbr.rel target = $region19
    $region24: #{tpu_custom_call.1} parent=1 // loop_exit
      _
    // Predicated region
    $region25: #{tpu_custom_call.1} parent=1 // pred_check
      _
    $region26: #{tpu_custom_call.1} parent=1 // pred_check_branch
      %166 = sbr.rel (0) target = $region28
    $region27: #{tpu_custom_call.1} parent=1 // pred_region
      %s168 = ssub.s32 512, 512
      %169 = vsyncadd [#allocation4], %s168
      %s170 = sshll.u32 [#allocation5], 4
      %s171 = int_to_ptr.vmem [resolvable:$true] %s170
      %176 = dma.vmem_to_hbm [thread:$0]  %s171, 512, %s3, [#allocation4], 256, 256, 16
    $region28: #{tpu_custom_call.1} parent=1 // pred_fallthru
      _
    // Predicated region
    $region29: #{tpu_custom_call.1} parent=1 // pred_check
      _
    $region30: #{tpu_custom_call.1} parent=1 // pred_check_branch
      %178 = sbr.rel (0) target = $region32
    $region31: #{tpu_custom_call.1} parent=1 // pred_region
      %179 = dma.done [#allocation4], 512
    $region32: #{tpu_custom_call.1} parent=1 // pred_fallthru
      _
    %180 = vsyncpa [#allocation3], 1
    %181 = vsyncpa [#allocation4], 1

</llo_original>
